<compile_context>
chip_gen: v6e
topology: v6e:2x2x1
jax: 0.10.0
libtpu: 0.0.40
codegen_flags: <defaults>
</compile_context>

<pallas_src>
import jax
import jax.numpy as jnp
from jax.experimental import pallas as pl
from jax.experimental.pallas import tpu as pltpu


# ---------------------------------------------------------------------------
# Kernels
# ---------------------------------------------------------------------------
def _mha_expanded_kernel(s_ref, t_ref, wqe_ref, wke_ref, o_ref):
    # s_ref, t_ref : (TB, D);  wqe_ref/wke_ref : (D, D*D) resident expanded weights
    # o_ref : (TB, D*D) lane-dense output slab
    q_exp = jnp.dot(s_ref[...], wqe_ref[...], preferred_element_type=jnp.float32)
    k_exp = jnp.dot(t_ref[...], wke_ref[...], preferred_element_type=jnp.float32)
    # f32 accumulation; cast only at the store (bf16 output halves HBM write bytes).
    o_ref[...] = (q_exp * k_exp).astype(o_ref.dtype)
    # TODO(synk): if the v7x bundle dump shows q_exp/k_exp spilling through VMEM
    # (vst-slot bound), chunk the D*D lane axis with lax.fori_loop(unroll=True) and
    # store each chunk directly into o_ref[:, pl.ds(...)].


def _mha_direct_kernel(s_ref, t_ref, wqt_ref, wkt_ref, o_ref):
    # s_ref, t_ref : (TB, D);  wqt_ref : (D, D) resident;  wkt_ref : (D, TN) lane tile
    # o_ref : (TB, D, TN)
    q = jnp.dot(s_ref[...], wqt_ref[...], preferred_element_type=jnp.float32)  # (TB, D)
    k = jnp.dot(t_ref[...], wkt_ref[...], preferred_element_type=jnp.float32)  # (TB, TN)
    # Batched outer product on the VPU (MXU with depth-1 contraction would be wasteful).
    o_ref[...] = (q[:, :, None] * k[:, None, :]).astype(o_ref.dtype)


# ---------------------------------------------------------------------------
# Generation-aware sizing
# ---------------------------------------------------------------------------
def _round_up(x, m):
    return ((x + m - 1) // m) * m


def _tpu_budgets():
    """Returns (per-step block budget bytes, vmem_limit_bytes, expanded-path D cutoff)."""
    kind = ""
    try:
        kind = jax.devices()[0].device_kind.lower()
    except Exception:
        kind = ""
    vmem_cap = None
    try:
        vmem_cap = pltpu.get_tpu_info().vmem_capacity_bytes
    except Exception:
        vmem_cap = None
    if vmem_cap is None:
        # Conservative default = v7x-class (64 MiB physical VMEM per TensorCore).
        vmem_cap = 64 * 1024 * 1024
        if "v5" in kind or "v6" in kind:
            vmem_cap = 128 * 1024 * 1024
    if vmem_cap >= 100 * 1024 * 1024:          # v5e / v6e: 128 MiB physical VMEM
        block_budget = 24 * 1024 * 1024        # per-step working set (out x2 + temps)
        vmem_limit = 64 * 1024 * 1024
    else:                                      # v7x-class: 64 MiB physical VMEM
        block_budget = 8 * 1024 * 1024
        vmem_limit = 32 * 1024 * 1024
    # v5e: the D^3 expanded formulation turns MXU-bound past D ~ 64 (f32, 4x128^2 MXU).
    is_v5e = ("v5 lite" in kind) or ("v5e" in kind) or ("v5litepod" in kind)
    cutoff = 64 if is_v5e else 128
    return block_budget, vmem_limit, cutoff


def _use_expanded_path(D, vmem_limit, cutoff):
    # Two (D, D*D) f32 expanded weights, double-buffered by the pipeline, must leave
    # at least 2/3 of the VMEM limit for output blocks / intermediates / inputs.
    expanded_weight_bytes = 2 * 2 * D * D * D * 4
    return (D % 128 != 0) and (D <= cutoff) and (3 * expanded_weight_bytes <= vmem_limit)


# ---------------------------------------------------------------------------
# Wrapper
# ---------------------------------------------------------------------------
def multi_head_attention(s, t, wq, wk, *, out_dtype=None, tb=512,
                         force_direct=False, _prepared=None):
    """Forward pass of MultiHeadAttention.

    s, t : (B, D) inputs.  wq, wk : (D, D) nn.Linear weights, layout (out, in).
    Returns (B, D, D) with out[b] = outer(s[b] @ wq.T, t[b] @ wk.T).
    Pass out_dtype=jnp.bfloat16 to halve output HBM traffic (f32 accumulation kept).
    """
    B, D = s.shape
    out_dtype = jnp.dtype(out_dtype) if out_dtype is not None else jnp.dtype(s.dtype)
    out_itemsize = out_dtype.itemsize
    block_budget, vmem_limit, cutoff = _tpu_budgets()

    # Keep >= ~4 grid steps (when B allows) so output writeback overlaps compute and
    # v7x's second TensorCore gets work via dimension_semantics=("parallel", ...).
    step_cap = _round_up(pl.cdiv(B, 4), 8)

    if _use_expanded_path(D, vmem_limit, cutoff) and not force_direct:
        if _prepared is not None and "wq_exp" in _prepared:
            wq_exp, wk_exp = _prepared["wq_exp"], _prepared["wk_exp"]
        else:
            # wq_exp[m, i*D+j] = wq[i, m]; wk_exp[m, i*D+j] = wk[j, m]
            wq_exp = jnp.repeat(wq.T, D, axis=1)       # (D, D*D)
            wk_exp = jnp.tile(wk.T, (1, D))            # (D, D*D)

        # Per-row VMEM cost inside a grid step: double-buffered output block plus the
        # two f32 matmul intermediates (q_exp, k_exp).
        per_row = D * D * (2 * out_itemsize + 2 * 4)
        rows_budget = max(8, block_budget // per_row)
        TB = max(8, (min(tb, rows_budget, step_cap) // 8) * 8)
        if B <= TB:
            TB = B
        grid = (pl.cdiv(B, TB),)

        flops = 4 * B * D * D * D + B * D * D
        bytes_accessed = (2 * B * D + 2 * D * D * D) * 4 + B * D * D * out_itemsize

        out2d = pl.pallas_call(
            _mha_expanded_kernel,
            out_shape=jax.ShapeDtypeStruct((B, D * D), out_dtype),
            grid_spec=pltpu.PrefetchScalarGridSpec(
                num_scalar_prefetch=0,
                grid=grid,
                in_specs=[
                    pl.BlockSpec((TB, D), lambda i: (i, 0)),       # s rows
                    pl.BlockSpec((TB, D), lambda i: (i, 0)),       # t rows
                    pl.BlockSpec((D, D * D), lambda i: (0, 0)),    # Wq_exp (resident)
                    pl.BlockSpec((D, D * D), lambda i: (0, 0)),    # Wk_exp (resident)
                ],
                out_specs=pl.BlockSpec((TB, D * D), lambda i: (i, 0)),
            ),
            compiler_params=pltpu.CompilerParams(
                dimension_semantics=("parallel",),
                vmem_limit_bytes=vmem_limit),
            cost_estimate=pl.CostEstimate(
                flops=flops, transcendentals=0, bytes_accessed=bytes_accessed),
        )(s, t, wq_exp, wk_exp)
        # (B, D*D) is row-major identical memory to (B, D, D).
        return out2d.reshape(B, D, D)

    # ---------------- Direct path (large D or D % 128 == 0) ----------------
    if _prepared is not None and "wq_t" in _prepared:
        wq_t, wk_t = _prepared["wq_t"], _prepared["wk_t"]
    else:
        wq_t = wq.T
        wk_t = wk.T

    # Tile the second (lane) D of the output when even a TB=8 full-D block would blow
    # the per-step budget; TN = 128 keeps stores lane-dense and unmasked.
    if 8 * D * D * out_itemsize > block_budget and D % 128 == 0:
        TN = 128
    else:
        TN = D
        # TODO(synk): very large D that is not a multiple of 128 still yields a full-D
        # lane block here; use a padded TN=128 grid if such shapes ever show up.

    # Double-buffered output block + the q/k projection intermediates.
    per_row = D * TN * 2 * out_itemsize + 2 * D * 4
    rows_budget = max(8, block_budget // per_row)
    # TB stays a multiple of 8 because the 2-D (TB, D) input blocks place TB on the
    # sublane axis; the old large-D VMEM blow-up is fixed by TN tiling instead.
    TB = max(8, (min(tb, rows_budget, step_cap) // 8) * 8)
    if B <= TB:
        TB = B
    grid = (pl.cdiv(B, TB), pl.cdiv(D, TN))

    flops = 4 * B * D * D + B * D * D
    bytes_accessed = (2 * B * D + 2 * D * D) * 4 + B * D * D * out_itemsize

    return pl.pallas_call(
        _mha_direct_kernel,
        out_shape=jax.ShapeDtypeStruct((B, D, D), out_dtype),
        grid_spec=pltpu.PrefetchScalarGridSpec(
            num_scalar_prefetch=0,
            grid=grid,
            in_specs=[
                pl.BlockSpec((TB, D), lambda i, j: (i, 0)),     # s rows
                pl.BlockSpec((TB, D), lambda i, j: (i, 0)),     # t rows
                pl.BlockSpec((D, D), lambda i, j: (0, 0)),      # Wq^T (resident)
                pl.BlockSpec((D, TN), lambda i, j: (0, j)),     # Wk^T lane tile
            ],
            out_specs=pl.BlockSpec((TB, D, TN), lambda i, j: (i, 0, j)),
        ),
        compiler_params=pltpu.CompilerParams(
            dimension_semantics=("parallel", "parallel"),
            vmem_limit_bytes=vmem_limit),
        cost_estimate=pl.CostEstimate(
            flops=flops, transcendentals=0, bytes_accessed=bytes_accessed),
    )(s, t, wq_t, wk_t)


def make_multi_head_attention(wq, wk, *, num_heads=None, out_dtype=None, tb=512,
                              force_direct=False):
    """Factory mirroring the PyTorch module: pre-bakes the (expanded) weights once per
    weight value so no D^3-byte repeat/tile runs (and round-trips HBM) on every call."""
    del num_heads  # stored by the PyTorch module but unused in forward()
    D = wq.shape[0]
    _, vmem_limit, cutoff = _tpu_budgets()

    prepared = {}
    if _use_expanded_path(D, vmem_limit, cutoff) and not force_direct:
        prepared["wq_exp"] = jnp.repeat(wq.T, D, axis=1)
        prepared["wk_exp"] = jnp.tile(wk.T, (1, D))
    else:
        prepared["wq_t"] = wq.T
        prepared["wk_t"] = wk.T

    @jax.jit
    def apply(s, t):
        return multi_head_attention(s, t, wq, wk, out_dtype=out_dtype, tb=tb,
                                    force_direct=force_direct, _prepared=prepared)

    return apply


if __name__ == "__main__":
    B = 2          # batch
    D = 32         # input_dim (hidden)
    num_heads = 4  # stored by the module but unused in forward()

    key = jax.random.PRNGKey(0)
    k_s, k_t, k_wq, k_wk = jax.random.split(key, 4)

    s = jax.random.normal(k_s, (B, D), dtype=jnp.float32)
    t = jax.random.normal(k_t, (B, D), dtype=jnp.float32)

    # Deterministic xavier_normal_ init for the (out, in) = (D, D) Linear weights:
    # std = sqrt(2 / (fan_in + fan_out)) = sqrt(1 / D)
    xavier_std = (2.0 / (D + D)) ** 0.5
    wq = xavier_std * jax.random.normal(k_wq, (D, D), dtype=jnp.float32)
    wk = xavier_std * jax.random.normal(k_wk, (D, D), dtype=jnp.float32)

    # Pure-JAX reference.
    ref = (s @ wq.T)[:, :, None] * (t @ wk.T)[:, None, :]   # (B, D, D)

    # Primary (lane-dense expanded) path via the caching factory; f32 output matches
    # the PyTorch reference exactly.
    mha = make_multi_head_attention(wq, wk, num_heads=num_heads)
    out = jax.block_until_ready(mha(s, t))
    assert out.shape == (B, D, D), out.shape
    assert jnp.allclose(out, ref, atol=1e-5, rtol=1e-5), \
        float(jnp.max(jnp.abs(out - ref)))

    # Opt-in bf16 output (half the HBM write traffic; f32 accumulation in-kernel).
    mha_bf16 = make_multi_head_attention(wq, wk, num_heads=num_heads,
                                         out_dtype=jnp.bfloat16)
    out_bf16 = jax.block_until_ready(mha_bf16(s, t))
    assert out_bf16.dtype == jnp.bfloat16
    assert jnp.allclose(out_bf16.astype(jnp.float32), ref, atol=5e-2, rtol=5e-2), \
        float(jnp.max(jnp.abs(out_bf16.astype(jnp.float32) - ref)))

    # Also exercise the direct (large-D fallback) path once at these small shapes.
    out_direct = jax.block_until_ready(
        multi_head_attention(s, t, wq, wk, force_direct=True))
    assert out_direct.shape == (B, D, D), out_direct.shape
    assert jnp.allclose(out_direct, ref, atol=1e-5, rtol=1e-5), \
        float(jnp.max(jnp.abs(out_direct - ref)))

    print("KERNEL_OK")
</pallas_src>

<mosaic_0001>
module attributes {stable_mosaic.version = 11 : i64} {
  func.func @_mha_expanded_kernel(%arg0: i32, %arg1: memref<2x32xf32, #tpu.memory_space<vmem>>, %arg2: memref<2x32xf32, #tpu.memory_space<vmem>>, %arg3: memref<32x1024xf32, #tpu.memory_space<vmem>>, %arg4: memref<32x1024xf32, #tpu.memory_space<vmem>>, %arg5: memref<2x1024xf32, #tpu.memory_space<vmem>>) attributes {dimension_semantics = [#tpu.dimension_semantics<parallel>], iteration_bounds = array<i64: 1>, scalar_prefetch = 0 : i64, scratch_operands = 0 : i64, tpu.core_type = #tpu.core_type<tc>, window_params = [{transform_indices = @transform_0, window_bounds = array<i64: 2, 32>}, {transform_indices = @transform_1, window_bounds = array<i64: 2, 32>}, {pipeline_mode = #tpu.pipeline_mode<synchronous>, transform_indices = @transform_2, window_bounds = array<i64: 32, 1024>}, {pipeline_mode = #tpu.pipeline_mode<synchronous>, transform_indices = @transform_3, window_bounds = array<i64: 32, 1024>}, {transform_indices = @transform_4, window_bounds = array<i64: 2, 1024>}]} {
    %c0 = arith.constant 0 : index
    %c0_0 = arith.constant 0 : index
    %0 = vector.load %arg1[%c0, %c0_0] : memref<2x32xf32, #tpu.memory_space<vmem>>, vector<2x32xf32>
    %c0_1 = arith.constant 0 : index
    %c0_2 = arith.constant 0 : index
    %1 = vector.load %arg3[%c0_1, %c0_2] : memref<32x1024xf32, #tpu.memory_space<vmem>>, vector<32x1024xf32>
    %cst = arith.constant dense<0.000000e+00> : vector<2x1024xf32>
    %2 = tpu.matmul %0, %1, %cst {dimension_numbers = #tpu.dot_dimension_numbers<[1], [0], [0], [1], [0, 0, 1, 1], [], []>} : vector<2x32xf32>, vector<32x1024xf32>, vector<2x1024xf32> -> vector<2x1024xf32>
    %c0_3 = arith.constant 0 : index
    %c0_4 = arith.constant 0 : index
    %3 = vector.load %arg2[%c0_3, %c0_4] : memref<2x32xf32, #tpu.memory_space<vmem>>, vector<2x32xf32>
    %c0_5 = arith.constant 0 : index
    %c0_6 = arith.constant 0 : index
    %4 = vector.load %arg4[%c0_5, %c0_6] : memref<32x1024xf32, #tpu.memory_space<vmem>>, vector<32x1024xf32>
    %cst_7 = arith.constant dense<0.000000e+00> : vector<2x1024xf32>
    %5 = tpu.matmul %3, %4, %cst_7 {dimension_numbers = #tpu.dot_dimension_numbers<[1], [0], [0], [1], [0, 0, 1, 1], [], []>} : vector<2x32xf32>, vector<32x1024xf32>, vector<2x1024xf32> -> vector<2x1024xf32>
    %6 = arith.mulf %2, %5 : vector<2x1024xf32>
    %c0_8 = arith.constant 0 : index
    %c0_9 = arith.constant 0 : index
    %7 = vector.load %arg5[%c0_8, %c0_9] : memref<2x1024xf32, #tpu.memory_space<vmem>>, vector<2x1024xf32>
    tpu.vector_store %arg5[%c0_8, %c0_9], %6 {strides = array<i32>} : memref<2x1024xf32, #tpu.memory_space<vmem>>, vector<2x1024xf32>,
    return
  }
  func.func @transform_0(%arg0: i32) -> (i32, i32) {
    %c0_i32 = arith.constant 0 : i32
    %c0_i32_0 = arith.constant 0 : i32
    return %arg0, %c0_i32 : i32, i32
  }
  func.func @transform_1(%arg0: i32) -> (i32, i32) {
    %c0_i32 = arith.constant 0 : i32
    %c0_i32_0 = arith.constant 0 : i32
    return %arg0, %c0_i32 : i32, i32
  }
  func.func @transform_2(%arg0: i32) -> (i32, i32) {
    %c0_i32 = arith.constant 0 : i32
    %c0_i32_0 = arith.constant 0 : i32
    %c0_i32_1 = arith.constant 0 : i32
    return %c0_i32, %c0_i32_0 : i32, i32
  }
  func.func @transform_3(%arg0: i32) -> (i32, i32) {
    %c0_i32 = arith.constant 0 : i32
    %c0_i32_0 = arith.constant 0 : i32
    %c0_i32_1 = arith.constant 0 : i32
    return %c0_i32, %c0_i32_0 : i32, i32
  }
  func.func @transform_4(%arg0: i32) -> (i32, i32) {
    %c0_i32 = arith.constant 0 : i32
    %c0_i32_0 = arith.constant 0 : i32
    return %arg0, %c0_i32 : i32, i32
  }
}

</mosaic_0001>

<llo_original>
// kernel: apply.1
$region0: #{apply.1}
  #allocation0 [shape = 'u32[]', space=smem, size = 0x4, offset = 0x4, fixed_abs, tag = 'smem constant byte address 0x4 - core index']
  #allocation1 [shape = 'u32[144,128]{1,0:T(1,128)}', space=vmem, size = 0x12000, scoped, tag = 'internal scratch']
  %s0 = inlined_call_operand.hbm [shape: f32[2,32], index: 0, kind: input, shape index: {}]
  %s1 = inlined_call_operand.hbm [shape: f32[2,32], index: 1, kind: input, shape index: {}]
  %s2 = inlined_call_operand.hbm [shape: f32[32,1024], index: 2, kind: input, shape index: {}]
  %s3 = inlined_call_operand.hbm [shape: f32[32,1024], index: 3, kind: input, shape index: {}]
  %s4 = inlined_call_operand.vmem [shape: f32[2,1024], index: 4, kind: output, shape index: {}]
  %s5 = sld [smem:[#allocation0]]
  $region42: #{apply.1} parent=0
    _
  %s7 = ssub.s32 1, %s5
  %s8 = scalar_select 0, %s7, %s5
  $region1: #{apply.1} parent=0
    #allocation2 [shape = 'u8[1024]{0}', space=vmem, size = 0x400, scoped, tag = 'input window, operand 0, single buffered']
    #allocation3 [shape = 's32[1]{0}', space=sflag, size = 0x4, scoped, tag = 'scoped memory for apply.1']
    #allocation4 [shape = 'u8[1024]{0}', space=vmem, size = 0x400, scoped, tag = 'input window, operand 1, single buffered']
    #allocation5 [shape = 's32[1]{0}', space=sflag, size = 0x4, scoped, tag = 'scoped memory for apply.1']
    #allocation6 [shape = 'u8[131072]{0}', space=vmem, size = 0x20000, scoped, tag = 'input window, operand 2, single buffered']
    #allocation7 [shape = 'u8[131072]{0}', space=vmem, size = 0x20000, scoped, tag = 'input window, operand 3, single buffered']
    #allocation8 [shape = 's32[1]{0}', space=sflag, size = 0x4, scoped, tag = 'scoped memory for apply.1']
    %9 = vsyncpa [#allocation3], 0
    %10 = vsyncpa [#allocation5], 0
    %11 = vsyncpa [#allocation8], 0
    // Predicated region
    $region2: #{apply.1} parent=1 // pred_check
      _
    $region3: #{apply.1} parent=1 // pred_check_branch
      %13 = sbr.rel (0) target = $region5
    $region4: #{apply.1} parent=1 // pred_region
      %s15 = ssub.s32 32, 32
      %16 = vsyncadd [#allocation3], %s15
      %s18 = sshll.u32 [#allocation2], 4
      %s19 = int_to_ptr.vmem [resolvable:$true] %s18
      %21 = dma.hbm_to_vmem [thread:$0]  %s0, 32, %s19, [#allocation3]
    $region5: #{apply.1} parent=1 // pred_fallthru
      _
    // Predicated region
    $region6: #{apply.1} parent=1 // pred_check
      _
    $region7: #{apply.1} parent=1 // pred_check_branch
      %23 = sbr.rel (0) target = $region9
    $region8: #{apply.1} parent=1 // pred_region
      %s25 = ssub.s32 32, 32
      %26 = vsyncadd [#allocation5], %s25
      %s28 = sshll.u32 [#allocation4], 4
      %s29 = int_to_ptr.vmem [resolvable:$true] %s28
      %31 = dma.hbm_to_vmem [thread:$0]  %s1, 32, %s29, [#allocation5]
    $region9: #{apply.1} parent=1 // pred_fallthru
      _
    // Predicated region
    $region10: #{apply.1} parent=1 // pred_check
      _
    $region11: #{apply.1} parent=1 // pred_check_branch
      %33 = sbr.rel (0) target = $region13
    $region12: #{apply.1} parent=1 // pred_region
      %s35 = ssub.s32 4096, 4096
      %36 = vsyncadd [#allocation5], %s35
      %s37 = sshll.u32 [#allocation6], 4
      %s38 = int_to_ptr.vmem [resolvable:$true] %s37
      %43 = dma.hbm_to_vmem [thread:$0]  %s2, 4096, %s38, [#allocation5], 1024, 1024, 64
    $region13: #{apply.1} parent=1 // pred_fallthru
      _
    // Predicated region
    $region14: #{apply.1} parent=1 // pred_check
      _
    $region15: #{apply.1} parent=1 // pred_check_branch
      %45 = sbr.rel (0) target = $region17
    $region16: #{apply.1} parent=1 // pred_region
      %s47 = ssub.s32 4096, 4096
      %48 = vsyncadd [#allocation8], %s47
      %s49 = sshll.u32 [#allocation7], 4
      %s50 = int_to_ptr.vmem [resolvable:$true] %s49
      %55 = dma.hbm_to_vmem [thread:$0]  %s3, 4096, %s50, [#allocation8], 1024, 1024, 64
    $region17: #{apply.1} parent=1 // pred_fallthru
      _
    // Predicated region
    $region18: #{apply.1} parent=1 // pred_check
      _
    $region19: #{apply.1} parent=1 // pred_check_branch
      %57 = sbr.rel (0) target = $region21
    $region20: #{apply.1} parent=1 // pred_region
      %58 = dma.done [#allocation3], 32
    $region21: #{apply.1} parent=1 // pred_fallthru
      _
    // Predicated region
    $region22: #{apply.1} parent=1 // pred_check
      _
    $region23: #{apply.1} parent=1 // pred_check_branch
      %60 = sbr.rel (0) target = $region25
    $region24: #{apply.1} parent=1 // pred_region
      %61 = dma.done [#allocation5], 32
    $region25: #{apply.1} parent=1 // pred_fallthru
      _
    // Predicated region
    $region26: #{apply.1} parent=1 // pred_check
      _
    $region27: #{apply.1} parent=1 // pred_check_branch
      %63 = sbr.rel (0) target = $region29
    $region28: #{apply.1} parent=1 // pred_region
      %64 = dma.done [#allocation5], 4096
    $region29: #{apply.1} parent=1 // pred_fallthru
      _
    // Predicated region
    $region30: #{apply.1} parent=1 // pred_check
      _
    $region31: #{apply.1} parent=1 // pred_check_branch
      %66 = sbr.rel (0) target = $region33
    $region32: #{apply.1} parent=1 // pred_region
      %67 = dma.done [#allocation8], 4096
    $region33: #{apply.1} parent=1 // pred_fallthru
      _
    %v68 = vld [vmem:[#allocation2] sm:$0x3]
    %v69 = vld [vmem:[#allocation6] sm:$0xff]
    %v70 = vld [vmem:[#allocation6 + $0x8] sm:$0xff]
    %v71 = vld [vmem:[#allocation6 + $0x10] sm:$0xff]
    %v72 = vld [vmem:[#allocation6 + $0x18] sm:$0xff]
    %v73 = vld [vmem:[#allocation6 + $0x20] sm:$0xff]
    %v74 = vld [vmem:[#allocation6 + $0x28] sm:$0xff]
    %v75 = vld [vmem:[#allocation6 + $0x30] sm:$0xff]
    %v76 = vld [vmem:[#allocation6 + $0x38] sm:$0xff]
    %v77 = vld [vmem:[#allocation6 + $0x40] sm:$0xff]
    %v78 = vld [vmem:[#allocation6 + $0x48] sm:$0xff]
    %v79 = vld [vmem:[#allocation6 + $0x50] sm:$0xff]
    %v80 = vld [vmem:[#allocation6 + $0x58] sm:$0xff]
    %v81 = vld [vmem:[#allocation6 + $0x60] sm:$0xff]
    %v82 = vld [vmem:[#allocation6 + $0x68] sm:$0xff]
    %v83 = vld [vmem:[#allocation6 + $0x70] sm:$0xff]
    %v84 = vld [vmem:[#allocation6 + $0x78] sm:$0xff]
    %v85 = vld [vmem:[#allocation6 + $0x80] sm:$0xff]
    %v86 = vld [vmem:[#allocation6 + $0x88] sm:$0xff]
    %v87 = vld [vmem:[#allocation6 + $0x90] sm:$0xff]
    %v88 = vld [vmem:[#allocation6 + $0x98] sm:$0xff]
    %v89 = vld [vmem:[#allocation6 + $0xa0] sm:$0xff]
    %v90 = vld [vmem:[#allocation6 + $0xa8] sm:$0xff]
    %v91 = vld [vmem:[#allocation6 + $0xb0] sm:$0xff]
    %v92 = vld [vmem:[#allocation6 + $0xb8] sm:$0xff]
    %v93 = vld [vmem:[#allocation6 + $0xc0] sm:$0xff]
    %v94 = vld [vmem:[#allocation6 + $0xc8] sm:$0xff]
    %v95 = vld [vmem:[#allocation6 + $0xd0] sm:$0xff]
    %v96 = vld [vmem:[#allocation6 + $0xd8] sm:$0xff]
    %v97 = vld [vmem:[#allocation6 + $0xe0] sm:$0xff]
    %v98 = vld [vmem:[#allocation6 + $0xe8] sm:$0xff]
    %v99 = vld [vmem:[#allocation6 + $0xf0] sm:$0xff]
    %v100 = vld [vmem:[#allocation6 + $0xf8] sm:$0xff]
    %vm101 = vcmask 261120
    %v103 = vsel %vm101, %v68, 0
    %105 = vmatprep.subr.mxu0 0.0
    %106 = vmatpush1.msra.mxu0 0.0
    %107 = vmatprep.subr.mxu0 0.0
    %108 = vmatpush1.msra.mxu0 0.0
    %109 = vmatprep.subr.mxu0 0.0
    %110 = vmatpush1.msra.mxu0 0.0
    %111 = vmatprep.subr.mxu0 0.0
    %112 = vmatpush1.msra.mxu0 0.0
    %113 = vmatprep.subr.mxu0 0.0
    %114 = vmatpush1.msra.mxu0 0.0
    %115 = vmatprep.subr.mxu0 0.0
    %116 = vmatpush1.msra.mxu0 0.0
    %117 = vmatprep.subr.mxu0 0.0
    %118 = vmatpush1.msra.mxu0 0.0
    %119 = vmatprep.subr.mxu0 0.0
    %120 = vmatpush1.msra.mxu0 0.0
    %121 = vmatprep.subr.mxu0 0.0
    %122 = vmatpush1.msra.mxu0 0.0
    %123 = vmatprep.subr.mxu0 0.0
    %124 = vmatpush1.msra.mxu0 0.0
    %125 = vmatprep.subr.mxu0 0.0
    %126 = vmatpush1.msra.mxu0 0.0
    %127 = vmatprep.subr.mxu0 0.0
    %128 = vmatpush1.msra.mxu0 0.0
    %129 = vmatprep.subr.mxu0 %v94
    %130 = vmatpush1.msra.mxu0 %v93
    %131 = vmatprep.subr.mxu0 %v86
    %132 = vmatpush1.msra.mxu0 %v85
    %133 = vmatprep.subr.mxu0 %v78
    %134 = vmatpush1.msra.mxu0 %v77
    %135 = vmatprep.subr.mxu0 %v70
    %136 = vmatpush1.msra.mxu0 %v69
    %137 = vmatprep.subr.mxu0 0.0
    %138 = vmatpush2.msra.mxu0 0.0
    %139 = vmatprep.subr.mxu0 0.0
    %140 = vmatpush2.msra.mxu0 0.0
    %141 = vmatprep.subr.mxu0 0.0
    %142 = vmatpush2.msra.mxu0 0.0
    %143 = vmatprep.subr.mxu0 0.0
    %144 = vmatpush2.msra.mxu0 0.0
    %145 = vmatprep.subr.mxu0 0.0
    %146 = vmatpush2.msra.mxu0 0.0
    %147 = vmatprep.subr.mxu0 0.0
    %148 = vmatpush2.msra.mxu0 0.0
    %149 = vmatprep.subr.mxu0 0.0
    %150 = vmatpush2.msra.mxu0 0.0
    %151 = vmatprep.subr.mxu0 0.0
    %152 = vmatpush2.msra.mxu0 0.0
    %153 = vmatprep.subr.mxu0 0.0
    %154 = vmatpush2.msra.mxu0 0.0
    %155 = vmatprep.subr.mxu0 0.0
    %156 = vmatpush2.msra.mxu0 0.0
    %157 = vmatprep.subr.mxu0 0.0
    %158 = vmatpush2.msra.mxu0 0.0
    %159 = vmatprep.subr.mxu0 0.0
    %160 = vmatpush2.msra.mxu0 0.0
    %161 = vmatprep.subr.mxu0 0.0
    %162 = vmatpush2.msra.mxu0 0.0
    %163 = vmatprep.subr.mxu0 0.0
    %164 = vmatpush2.msra.mxu0 0.0
    %165 = vmatprep.subr.mxu0 0.0
    %166 = vmatpush2.msra.mxu0 0.0
    %167 = vmatprep.subr.mxu0 0.0
    %168 = vmatpush2.msra.mxu0 0.0
    %169 = vmatprep.mubr.f32.mxu0 0.0
    %170 = vmatmul.mubr.f32.gmra.mxu0 %v103
    %v171 = vpop.f32.mrf.mxu0
    %v172 = vadd.f32 0.0, %v171
    %v173 = vpop.f32.mrf.mxu0
    %v174 = vadd.f32 0.0, %v173
    %175 = vdwg.mxu0
    %176 = vmatprep.subr.mxu0 0.0
    %177 = vmatpush1.msra.mxu0 0.0
    %178 = vmatprep.subr.mxu0 0.0
    %179 = vmatpush1.msra.mxu0 0.0
    %180 = vmatprep.subr.mxu0 0.0
    %181 = vmatpush1.msra.mxu0 0.0
    %182 = vmatprep.subr.mxu0 0.0
    %183 = vmatpush1.msra.mxu0 0.0
    %184 = vmatprep.subr.mxu0 0.0
    %185 = vmatpush1.msra.mxu0 0.0
    %186 = vmatprep.subr.mxu0 0.0
    %187 = vmatpush1.msra.mxu0 0.0
    %188 = vmatprep.subr.mxu0 0.0
    %189 = vmatpush1.msra.mxu0 0.0
    %190 = vmatprep.subr.mxu0 0.0
    %191 = vmatpush1.msra.mxu0 0.0
    %192 = vmatprep.subr.mxu0 0.0
    %193 = vmatpush1.msra.mxu0 0.0
    %194 = vmatprep.subr.mxu0 0.0
    %195 = vmatpush1.msra.mxu0 0.0
    %196 = vmatprep.subr.mxu0 0.0
    %197 = vmatpush1.msra.mxu0 0.0
    %198 = vmatprep.subr.mxu0 0.0
    %199 = vmatpush1.msra.mxu0 0.0
    %200 = vmatprep.subr.mxu0 %v96
    %201 = vmatpush1.msra.mxu0 %v95
    %202 = vmatprep.subr.mxu0 %v88
    %203 = vmatpush1.msra.mxu0 %v87
    %204 = vmatprep.subr.mxu0 %v80
    %205 = vmatpush1.msra.mxu0 %v79
    %206 = vmatprep.subr.mxu0 %v72
    %207 = vmatpush1.msra.mxu0 %v71
    %208 = vmatprep.subr.mxu0 0.0
    %209 = vmatpush2.msra.mxu0 0.0
    %210 = vmatprep.subr.mxu0 0.0
    %211 = vmatpush2.msra.mxu0 0.0
    %212 = vmatprep.subr.mxu0 0.0
    %213 = vmatpush2.msra.mxu0 0.0
    %214 = vmatprep.subr.mxu0 0.0
    %215 = vmatpush2.msra.mxu0 0.0
    %216 = vmatprep.subr.mxu0 0.0
    %217 = vmatpush2.msra.mxu0 0.0
    %218 = vmatprep.subr.mxu0 0.0
    %219 = vmatpush2.msra.mxu0 0.0
    %220 = vmatprep.subr.mxu0 0.0
    %221 = vmatpush2.msra.mxu0 0.0
    %222 = vmatprep.subr.mxu0 0.0
    %223 = vmatpush2.msra.mxu0 0.0
    %224 = vmatprep.subr.mxu0 0.0
    %225 = vmatpush2.msra.mxu0 0.0
    %226 = vmatprep.subr.mxu0 0.0
    %227 = vmatpush2.msra.mxu0 0.0
    %228 = vmatprep.subr.mxu0 0.0
    %229 = vmatpush2.msra.mxu0 0.0
    %230 = vmatprep.subr.mxu0 0.0
    %231 = vmatpush2.msra.mxu0 0.0
    %232 = vmatprep.subr.mxu0 0.0
    %233 = vmatpush2.msra.mxu0 0.0
    %234 = vmatprep.subr.mxu0 0.0
    %235 = vmatpush2.msra.mxu0 0.0
    %236 = vmatprep.subr.mxu0 0.0
    %237 = vmatpush2.msra.mxu0 0.0
    %238 = vmatprep.subr.mxu0 0.0
    %239 = vmatpush2.msra.mxu0 0.0
    %240 = vmatprep.mubr.f32.mxu0 0.0
    %241 = vmatmul.mubr.f32.gmra.mxu0 %v103
    %v242 = vpop.f32.mrf.mxu0
    %v243 = vadd.f32 0.0, %v242
    %v244 = vpop.f32.mrf.mxu0
    %v245 = vadd.f32 0.0, %v244
    %246 = vdwg.mxu0
    %247 = vmatprep.subr.mxu0 0.0
    %248 = vmatpush1.msra.mxu0 0.0
    %249 = vmatprep.subr.mxu0 0.0
    %250 = vmatpush1.msra.mxu0 0.0
    %251 = vmatprep.subr.mxu0 0.0
    %252 = vmatpush1.msra.mxu0 0.0
    %253 = vmatprep.subr.mxu0 0.0
    %254 = vmatpush1.msra.mxu0 0.0
    %255 = vmatprep.subr.mxu0 0.0
    %256 = vmatpush1.msra.mxu0 0.0
    %257 = vmatprep.subr.mxu0 0.0
    %258 = vmatpush1.msra.mxu0 0.0
    %259 = vmatprep.subr.mxu0 0.0
    %260 = vmatpush1.msra.mxu0 0.0
    %261 = vmatprep.subr.mxu0 0.0
    %262 = vmatpush1.msra.mxu0 0.0
    %263 = vmatprep.subr.mxu0 0.0
    %264 = vmatpush1.msra.mxu0 0.0
    %265 = vmatprep.subr.mxu0 0.0
    %266 = vmatpush1.msra.mxu0 0.0
    %267 = vmatprep.subr.mxu0 0.0
    %268 = vmatpush1.msra.mxu0 0.0
    %269 = vmatprep.subr.mxu0 0.0
    %270 = vmatpush1.msra.mxu0 0.0
    %271 = vmatprep.subr.mxu0 %v98
    %272 = vmatpush1.msra.mxu0 %v97
    %273 = vmatprep.subr.mxu0 %v90
    %274 = vmatpush1.msra.mxu0 %v89
    %275 = vmatprep.subr.mxu0 %v82
    %276 = vmatpush1.msra.mxu0 %v81
    %277 = vmatprep.subr.mxu0 %v74
    %278 = vmatpush1.msra.mxu0 %v73
    %279 = vmatprep.subr.mxu0 0.0
    %280 = vmatpush2.msra.mxu0 0.0
    %281 = vmatprep.subr.mxu0 0.0
    %282 = vmatpush2.msra.mxu0 0.0
    %283 = vmatprep.subr.mxu0 0.0
    %284 = vmatpush2.msra.mxu0 0.0
    %285 = vmatprep.subr.mxu0 0.0
    %286 = vmatpush2.msra.mxu0 0.0
    %287 = vmatprep.subr.mxu0 0.0
    %288 = vmatpush2.msra.mxu0 0.0
    %289 = vmatprep.subr.mxu0 0.0
    %290 = vmatpush2.msra.mxu0 0.0
    %291 = vmatprep.subr.mxu0 0.0
    %292 = vmatpush2.msra.mxu0 0.0
    %293 = vmatprep.subr.mxu0 0.0
    %294 = vmatpush2.msra.mxu0 0.0
    %295 = vmatprep.subr.mxu0 0.0
    %296 = vmatpush2.msra.mxu0 0.0
    %297 = vmatprep.subr.mxu0 0.0
    %298 = vmatpush2.msra.mxu0 0.0
    %299 = vmatprep.subr.mxu0 0.0
    %300 = vmatpush2.msra.mxu0 0.0
    %301 = vmatprep.subr.mxu0 0.0
    %302 = vmatpush2.msra.mxu0 0.0
    %303 = vmatprep.subr.mxu0 0.0
    %304 = vmatpush2.msra.mxu0 0.0
    %305 = vmatprep.subr.mxu0 0.0
    %306 = vmatpush2.msra.mxu0 0.0
    %307 = vmatprep.subr.mxu0 0.0
    %308 = vmatpush2.msra.mxu0 0.0
    %309 = vmatprep.subr.mxu0 0.0
    %310 = vmatpush2.msra.mxu0 0.0
    %311 = vmatprep.mubr.f32.mxu0 0.0
    %312 = vmatmul.mubr.f32.gmra.mxu0 %v103
    %v313 = vpop.f32.mrf.mxu0
    %v314 = vadd.f32 0.0, %v313
    %v315 = vpop.f32.mrf.mxu0
    %v316 = vadd.f32 0.0, %v315
    %317 = vdwg.mxu0
    %318 = vmatprep.subr.mxu0 0.0
    %319 = vmatpush1.msra.mxu0 0.0
    %320 = vmatprep.subr.mxu0 0.0
    %321 = vmatpush1.msra.mxu0 0.0
    %322 = vmatprep.subr.mxu0 0.0
    %323 = vmatpush1.msra.mxu0 0.0
    %324 = vmatprep.subr.mxu0 0.0
    %325 = vmatpush1.msra.mxu0 0.0
    %326 = vmatprep.subr.mxu0 0.0
    %327 = vmatpush1.msra.mxu0 0.0
    %328 = vmatprep.subr.mxu0 0.0
    %329 = vmatpush1.msra.mxu0 0.0
    %330 = vmatprep.subr.mxu0 0.0
    %331 = vmatpush1.msra.mxu0 0.0
    %332 = vmatprep.subr.mxu0 0.0
    %333 = vmatpush1.msra.mxu0 0.0
    %334 = vmatprep.subr.mxu0 0.0
    %335 = vmatpush1.msra.mxu0 0.0
    %336 = vmatprep.subr.mxu0 0.0
    %337 = vmatpush1.msra.mxu0 0.0
    %338 = vmatprep.subr.mxu0 0.0
    %339 = vmatpush1.msra.mxu0 0.0
    %340 = vmatprep.subr.mxu0 0.0
    %341 = vmatpush1.msra.mxu0 0.0
    %342 = vmatprep.subr.mxu0 %v100
    %343 = vmatpush1.msra.mxu0 %v99
    %344 = vmatprep.subr.mxu0 %v92
    %345 = vmatpush1.msra.mxu0 %v91
    %346 = vmatprep.subr.mxu0 %v84
    %347 = vmatpush1.msra.mxu0 %v83
    %348 = vmatprep.subr.mxu0 %v76
    %349 = vmatpush1.msra.mxu0 %v75
    %350 = vmatprep.subr.mxu0 0.0
    %351 = vmatpush2.msra.mxu0 0.0
    %352 = vmatprep.subr.mxu0 0.0
    %353 = vmatpush2.msra.mxu0 0.0
    %354 = vmatprep.subr.mxu0 0.0
    %355 = vmatpush2.msra.mxu0 0.0
    %356 = vmatprep.subr.mxu0 0.0
    %357 = vmatpush2.msra.mxu0 0.0
    %358 = vmatprep.subr.mxu0 0.0
    %359 = vmatpush2.msra.mxu0 0.0
    %360 = vmatprep.subr.mxu0 0.0
    %361 = vmatpush2.msra.mxu0 0.0
    %362 = vmatprep.subr.mxu0 0.0
    %363 = vmatpush2.msra.mxu0 0.0
    %364 = vmatprep.subr.mxu0 0.0
    %365 = vmatpush2.msra.mxu0 0.0
    %366 = vmatprep.subr.mxu0 0.0
    %367 = vmatpush2.msra.mxu0 0.0
    %368 = vmatprep.subr.mxu0 0.0
    %369 = vmatpush2.msra.mxu0 0.0
    %370 = vmatprep.subr.mxu0 0.0
    %371 = vmatpush2.msra.mxu0 0.0
    %372 = vmatprep.subr.mxu0 0.0
    %373 = vmatpush2.msra.mxu0 0.0
    %374 = vmatprep.subr.mxu0 0.0
    %375 = vmatpush2.msra.mxu0 0.0
    %376 = vmatprep.subr.mxu0 0.0
    %377 = vmatpush2.msra.mxu0 0.0
    %378 = vmatprep.subr.mxu0 0.0
    %379 = vmatpush2.msra.mxu0 0.0
    %380 = vmatprep.subr.mxu0 0.0
    %381 = vmatpush2.msra.mxu0 0.0
    %382 = vmatprep.mubr.f32.mxu0 0.0
    %383 = vmatmul.mubr.f32.gmra.mxu0 %v103
    %v384 = vpop.f32.mrf.mxu0
    %v385 = vadd.f32 0.0, %v384
    %v386 = vpop.f32.mrf.mxu0
    %v387 = vadd.f32 0.0, %v386
    %388 = vdwg.mxu0
    %v389 = vld [vmem:[#allocation4] sm:$0x3]
    %v390 = vld [vmem:[#allocation7] sm:$0xff]
    %v391 = vld [vmem:[#allocation7 + $0x8] sm:$0xff]
    %v392 = vld [vmem:[#allocation7 + $0x10] sm:$0xff]
    %v393 = vld [vmem:[#allocation7 + $0x18] sm:$0xff]
    %v394 = vld [vmem:[#allocation7 + $0x20] sm:$0xff]
    %v395 = vld [vmem:[#allocation7 + $0x28] sm:$0xff]
    %v396 = vld [vmem:[#allocation7 + $0x30] sm:$0xff]
    %v397 = vld [vmem:[#allocation7 + $0x38] sm:$0xff]
    %v398 = vld [vmem:[#allocation7 + $0x40] sm:$0xff]
    %v399 = vld [vmem:[#allocation7 + $0x48] sm:$0xff]
    %v400 = vld [vmem:[#allocation7 + $0x50] sm:$0xff]
    %v401 = vld [vmem:[#allocation7 + $0x58] sm:$0xff]
    %v402 = vld [vmem:[#allocation7 + $0x60] sm:$0xff]
    %v403 = vld [vmem:[#allocation7 + $0x68] sm:$0xff]
    %v404 = vld [vmem:[#allocation7 + $0x70] sm:$0xff]
    %v405 = vld [vmem:[#allocation7 + $0x78] sm:$0xff]
    %v406 = vld [vmem:[#allocation7 + $0x80] sm:$0xff]
    %v407 = vld [vmem:[#allocation7 + $0x88] sm:$0xff]
    %v408 = vld [vmem:[#allocation7 + $0x90] sm:$0xff]
    %v409 = vld [vmem:[#allocation7 + $0x98] sm:$0xff]
    %v410 = vld [vmem:[#allocation7 + $0xa0] sm:$0xff]
    %v411 = vld [vmem:[#allocation7 + $0xa8] sm:$0xff]
    %v412 = vld [vmem:[#allocation7 + $0xb0] sm:$0xff]
    %v413 = vld [vmem:[#allocation7 + $0xb8] sm:$0xff]
    %v414 = vld [vmem:[#allocation7 + $0xc0] sm:$0xff]
    %v415 = vld [vmem:[#allocation7 + $0xc8] sm:$0xff]
    %v416 = vld [vmem:[#allocation7 + $0xd0] sm:$0xff]
    %v417 = vld [vmem:[#allocation7 + $0xd8] sm:$0xff]
    %v418 = vld [vmem:[#allocation7 + $0xe0] sm:$0xff]
    %v419 = vld [vmem:[#allocation7 + $0xe8] sm:$0xff]
    %v420 = vld [vmem:[#allocation7 + $0xf0] sm:$0xff]
    %v421 = vld [vmem:[#allocation7 + $0xf8] sm:$0xff]
    %v423 = vsel %vm101, %v389, 0
    %425 = vmatprep.subr.mxu0 0.0
    %426 = vmatpush1.msra.mxu0 0.0
    %427 = vmatprep.subr.mxu0 0.0
    %428 = vmatpush1.msra.mxu0 0.0
    %429 = vmatprep.subr.mxu0 0.0
    %430 = vmatpush1.msra.mxu0 0.0
    %431 = vmatprep.subr.mxu0 0.0
    %432 = vmatpush1.msra.mxu0 0.0
    %433 = vmatprep.subr.mxu0 0.0
    %434 = vmatpush1.msra.mxu0 0.0
    %435 = vmatprep.subr.mxu0 0.0
    %436 = vmatpush1.msra.mxu0 0.0
    %437 = vmatprep.subr.mxu0 0.0
    %438 = vmatpush1.msra.mxu0 0.0
    %439 = vmatprep.subr.mxu0 0.0
    %440 = vmatpush1.msra.mxu0 0.0
    %441 = vmatprep.subr.mxu0 0.0
    %442 = vmatpush1.msra.mxu0 0.0
    %443 = vmatprep.subr.mxu0 0.0
    %444 = vmatpush1.msra.mxu0 0.0
    %445 = vmatprep.subr.mxu0 0.0
    %446 = vmatpush1.msra.mxu0 0.0
    %447 = vmatprep.subr.mxu0 0.0
    %448 = vmatpush1.msra.mxu0 0.0
    %449 = vmatprep.subr.mxu0 %v415
    %450 = vmatpush1.msra.mxu0 %v414
    %451 = vmatprep.subr.mxu0 %v407
    %452 = vmatpush1.msra.mxu0 %v406
    %453 = vmatprep.subr.mxu0 %v399
    %454 = vmatpush1.msra.mxu0 %v398
    %455 = vmatprep.subr.mxu0 %v391
    %456 = vmatpush1.msra.mxu0 %v390
    %457 = vmatprep.subr.mxu0 0.0
    %458 = vmatpush2.msra.mxu0 0.0
    %459 = vmatprep.subr.mxu0 0.0
    %460 = vmatpush2.msra.mxu0 0.0
    %461 = vmatprep.subr.mxu0 0.0
    %462 = vmatpush2.msra.mxu0 0.0
    %463 = vmatprep.subr.mxu0 0.0
    %464 = vmatpush2.msra.mxu0 0.0
    %465 = vmatprep.subr.mxu0 0.0
    %466 = vmatpush2.msra.mxu0 0.0
    %467 = vmatprep.subr.mxu0 0.0
    %468 = vmatpush2.msra.mxu0 0.0
    %469 = vmatprep.subr.mxu0 0.0
    %470 = vmatpush2.msra.mxu0 0.0
    %471 = vmatprep.subr.mxu0 0.0
    %472 = vmatpush2.msra.mxu0 0.0
    %473 = vmatprep.subr.mxu0 0.0
    %474 = vmatpush2.msra.mxu0 0.0
    %475 = vmatprep.subr.mxu0 0.0
    %476 = vmatpush2.msra.mxu0 0.0
    %477 = vmatprep.subr.mxu0 0.0
    %478 = vmatpush2.msra.mxu0 0.0
    %479 = vmatprep.subr.mxu0 0.0
    %480 = vmatpush2.msra.mxu0 0.0
    %481 = vmatprep.subr.mxu0 0.0
    %482 = vmatpush2.msra.mxu0 0.0
    %483 = vmatprep.subr.mxu0 0.0
    %484 = vmatpush2.msra.mxu0 0.0
    %485 = vmatprep.subr.mxu0 0.0
    %486 = vmatpush2.msra.mxu0 0.0
    %487 = vmatprep.subr.mxu0 0.0
    %488 = vmatpush2.msra.mxu0 0.0
    %489 = vmatprep.mubr.f32.mxu0 0.0
    %490 = vmatmul.mubr.f32.gmra.mxu0 %v423
    %v491 = vpop.f32.mrf.mxu0
    %v492 = vadd.f32 0.0, %v491
    %v493 = vpop.f32.mrf.mxu0
    %v494 = vadd.f32 0.0, %v493
    %495 = vdwg.mxu0
    %496 = vmatprep.subr.mxu0 0.0
    %497 = vmatpush1.msra.mxu0 0.0
    %498 = vmatprep.subr.mxu0 0.0
    %499 = vmatpush1.msra.mxu0 0.0
    %500 = vmatprep.subr.mxu0 0.0
    %501 = vmatpush1.msra.mxu0 0.0
    %502 = vmatprep.subr.mxu0 0.0
    %503 = vmatpush1.msra.mxu0 0.0
    %504 = vmatprep.subr.mxu0 0.0
    %505 = vmatpush1.msra.mxu0 0.0
    %506 = vmatprep.subr.mxu0 0.0
    %507 = vmatpush1.msra.mxu0 0.0
    %508 = vmatprep.subr.mxu0 0.0
    %509 = vmatpush1.msra.mxu0 0.0
    %510 = vmatprep.subr.mxu0 0.0
    %511 = vmatpush1.msra.mxu0 0.0
    %512 = vmatprep.subr.mxu0 0.0
    %513 = vmatpush1.msra.mxu0 0.0
    %514 = vmatprep.subr.mxu0 0.0
    %515 = vmatpush1.msra.mxu0 0.0
    %516 = vmatprep.subr.mxu0 0.0
    %517 = vmatpush1.msra.mxu0 0.0
    %518 = vmatprep.subr.mxu0 0.0
    %519 = vmatpush1.msra.mxu0 0.0
    %520 = vmatprep.subr.mxu0 %v417
    %521 = vmatpush1.msra.mxu0 %v416
    %522 = vmatprep.subr.mxu0 %v409
    %523 = vmatpush1.msra.mxu0 %v408
    %524 = vmatprep.subr.mxu0 %v401
    %525 = vmatpush1.msra.mxu0 %v400
    %526 = vmatprep.subr.mxu0 %v393
    %527 = vmatpush1.msra.mxu0 %v392
    %528 = vmatprep.subr.mxu0 0.0
    %529 = vmatpush2.msra.mxu0 0.0
    %530 = vmatprep.subr.mxu0 0.0
    %531 = vmatpush2.msra.mxu0 0.0
    %532 = vmatprep.subr.mxu0 0.0
    %533 = vmatpush2.msra.mxu0 0.0
    %534 = vmatprep.subr.mxu0 0.0
    %535 = vmatpush2.msra.mxu0 0.0
    %536 = vmatprep.subr.mxu0 0.0
    %537 = vmatpush2.msra.mxu0 0.0
    %538 = vmatprep.subr.mxu0 0.0
    %539 = vmatpush2.msra.mxu0 0.0
    %540 = vmatprep.subr.mxu0 0.0
    %541 = vmatpush2.msra.mxu0 0.0
    %542 = vmatprep.subr.mxu0 0.0
    %543 = vmatpush2.msra.mxu0 0.0
    %544 = vmatprep.subr.mxu0 0.0
    %545 = vmatpush2.msra.mxu0 0.0
    %546 = vmatprep.subr.mxu0 0.0
    %547 = vmatpush2.msra.mxu0 0.0
    %548 = vmatprep.subr.mxu0 0.0
    %549 = vmatpush2.msra.mxu0 0.0
    %550 = vmatprep.subr.mxu0 0.0
    %551 = vmatpush2.msra.mxu0 0.0
    %552 = vmatprep.subr.mxu0 0.0
    %553 = vmatpush2.msra.mxu0 0.0
    %554 = vmatprep.subr.mxu0 0.0
    %555 = vmatpush2.msra.mxu0 0.0
    %556 = vmatprep.subr.mxu0 0.0
    %557 = vmatpush2.msra.mxu0 0.0
    %558 = vmatprep.subr.mxu0 0.0
    %559 = vmatpush2.msra.mxu0 0.0
    %560 = vmatprep.mubr.f32.mxu0 0.0
    %561 = vmatmul.mubr.f32.gmra.mxu0 %v423
    %v562 = vpop.f32.mrf.mxu0
    %v563 = vadd.f32 0.0, %v562
    %v564 = vpop.f32.mrf.mxu0
    %v565 = vadd.f32 0.0, %v564
    %566 = vdwg.mxu0
    %567 = vmatprep.subr.mxu0 0.0
    %568 = vmatpush1.msra.mxu0 0.0
    %569 = vmatprep.subr.mxu0 0.0
    %570 = vmatpush1.msra.mxu0 0.0
    %571 = vmatprep.subr.mxu0 0.0
    %572 = vmatpush1.msra.mxu0 0.0
    %573 = vmatprep.subr.mxu0 0.0
    %574 = vmatpush1.msra.mxu0 0.0
    %575 = vmatprep.subr.mxu0 0.0
    %576 = vmatpush1.msra.mxu0 0.0
    %577 = vmatprep.subr.mxu0 0.0
    %578 = vmatpush1.msra.mxu0 0.0
    %579 = vmatprep.subr.mxu0 0.0
    %580 = vmatpush1.msra.mxu0 0.0
    %581 = vmatprep.subr.mxu0 0.0
    %582 = vmatpush1.msra.mxu0 0.0
    %583 = vmatprep.subr.mxu0 0.0
    %584 = vmatpush1.msra.mxu0 0.0
    %585 = vmatprep.subr.mxu0 0.0
    %586 = vmatpush1.msra.mxu0 0.0
    %587 = vmatprep.subr.mxu0 0.0
    %588 = vmatpush1.msra.mxu0 0.0
    %589 = vmatprep.subr.mxu0 0.0
    %590 = vmatpush1.msra.mxu0 0.0
    %591 = vmatprep.subr.mxu0 %v419
    %592 = vmatpush1.msra.mxu0 %v418
    %593 = vmatprep.subr.mxu0 %v411
    %594 = vmatpush1.msra.mxu0 %v410
    %595 = vmatprep.subr.mxu0 %v403
    %596 = vmatpush1.msra.mxu0 %v402
    %597 = vmatprep.subr.mxu0 %v395
    %598 = vmatpush1.msra.mxu0 %v394
    %599 = vmatprep.subr.mxu0 0.0
    %600 = vmatpush2.msra.mxu0 0.0
    %601 = vmatprep.subr.mxu0 0.0
    %602 = vmatpush2.msra.mxu0 0.0
    %603 = vmatprep.subr.mxu0 0.0
    %604 = vmatpush2.msra.mxu0 0.0
    %605 = vmatprep.subr.mxu0 0.0
    %606 = vmatpush2.msra.mxu0 0.0
    %607 = vmatprep.subr.mxu0 0.0
    %608 = vmatpush2.msra.mxu0 0.0
    %609 = vmatprep.subr.mxu0 0.0
    %610 = vmatpush2.msra.mxu0 0.0
    %611 = vmatprep.subr.mxu0 0.0
    %612 = vmatpush2.msra.mxu0 0.0
    %613 = vmatprep.subr.mxu0 0.0
    %614 = vmatpush2.msra.mxu0 0.0
    %615 = vmatprep.subr.mxu0 0.0
    %616 = vmatpush2.msra.mxu0 0.0
    %617 = vmatprep.subr.mxu0 0.0
    %618 = vmatpush2.msra.mxu0 0.0
    %619 = vmatprep.subr.mxu0 0.0
    %620 = vmatpush2.msra.mxu0 0.0
    %621 = vmatprep.subr.mxu0 0.0
    %622 = vmatpush2.msra.mxu0 0.0
    %623 = vmatprep.subr.mxu0 0.0
    %624 = vmatpush2.msra.mxu0 0.0
    %625 = vmatprep.subr.mxu0 0.0
    %626 = vmatpush2.msra.mxu0 0.0
    %627 = vmatprep.subr.mxu0 0.0
    %628 = vmatpush2.msra.mxu0 0.0
    %629 = vmatprep.subr.mxu0 0.0
    %630 = vmatpush2.msra.mxu0 0.0
    %631 = vmatprep.mubr.f32.mxu0 0.0
    %632 = vmatmul.mubr.f32.gmra.mxu0 %v423
    %v633 = vpop.f32.mrf.mxu0
    %v634 = vadd.f32 0.0, %v633
    %v635 = vpop.f32.mrf.mxu0
    %v636 = vadd.f32 0.0, %v635
    %637 = vdwg.mxu0
    %638 = vmatprep.subr.mxu0 0.0
    %639 = vmatpush1.msra.mxu0 0.0
    %640 = vmatprep.subr.mxu0 0.0
    %641 = vmatpush1.msra.mxu0 0.0
    %642 = vmatprep.subr.mxu0 0.0
    %643 = vmatpush1.msra.mxu0 0.0
    %644 = vmatprep.subr.mxu0 0.0
    %645 = vmatpush1.msra.mxu0 0.0
    %646 = vmatprep.subr.mxu0 0.0
    %647 = vmatpush1.msra.mxu0 0.0
    %648 = vmatprep.subr.mxu0 0.0
    %649 = vmatpush1.msra.mxu0 0.0
    %650 = vmatprep.subr.mxu0 0.0
    %651 = vmatpush1.msra.mxu0 0.0
    %652 = vmatprep.subr.mxu0 0.0
    %653 = vmatpush1.msra.mxu0 0.0
    %654 = vmatprep.subr.mxu0 0.0
    %655 = vmatpush1.msra.mxu0 0.0
    %656 = vmatprep.subr.mxu0 0.0
    %657 = vmatpush1.msra.mxu0 0.0
    %658 = vmatprep.subr.mxu0 0.0
    %659 = vmatpush1.msra.mxu0 0.0
    %660 = vmatprep.subr.mxu0 0.0
    %661 = vmatpush1.msra.mxu0 0.0
    %662 = vmatprep.subr.mxu0 %v421
    %663 = vmatpush1.msra.mxu0 %v420
    %664 = vmatprep.subr.mxu0 %v413
    %665 = vmatpush1.msra.mxu0 %v412
    %666 = vmatprep.subr.mxu0 %v405
    %667 = vmatpush1.msra.mxu0 %v404
    %668 = vmatprep.subr.mxu0 %v397
    %669 = vmatpush1.msra.mxu0 %v396
    %670 = vmatprep.subr.mxu0 0.0
    %671 = vmatpush2.msra.mxu0 0.0
    %672 = vmatprep.subr.mxu0 0.0
    %673 = vmatpush2.msra.mxu0 0.0
    %674 = vmatprep.subr.mxu0 0.0
    %675 = vmatpush2.msra.mxu0 0.0
    %676 = vmatprep.subr.mxu0 0.0
    %677 = vmatpush2.msra.mxu0 0.0
    %678 = vmatprep.subr.mxu0 0.0
    %679 = vmatpush2.msra.mxu0 0.0
    %680 = vmatprep.subr.mxu0 0.0
    %681 = vmatpush2.msra.mxu0 0.0
    %682 = vmatprep.subr.mxu0 0.0
    %683 = vmatpush2.msra.mxu0 0.0
    %684 = vmatprep.subr.mxu0 0.0
    %685 = vmatpush2.msra.mxu0 0.0
    %686 = vmatprep.subr.mxu0 0.0
    %687 = vmatpush2.msra.mxu0 0.0
    %688 = vmatprep.subr.mxu0 0.0
    %689 = vmatpush2.msra.mxu0 0.0
    %690 = vmatprep.subr.mxu0 0.0
    %691 = vmatpush2.msra.mxu0 0.0
    %692 = vmatprep.subr.mxu0 0.0
    %693 = vmatpush2.msra.mxu0 0.0
    %694 = vmatprep.subr.mxu0 0.0
    %695 = vmatpush2.msra.mxu0 0.0
    %696 = vmatprep.subr.mxu0 0.0
    %697 = vmatpush2.msra.mxu0 0.0
    %698 = vmatprep.subr.mxu0 0.0
    %699 = vmatpush2.msra.mxu0 0.0
    %700 = vmatprep.subr.mxu0 0.0
    %701 = vmatpush2.msra.mxu0 0.0
    %702 = vmatprep.mubr.f32.mxu0 0.0
    %703 = vmatmul.mubr.f32.gmra.mxu0 %v423
    %v704 = vpop.f32.mrf.mxu0
    %v705 = vadd.f32 0.0, %v704
    %v706 = vpop.f32.mrf.mxu0
    %v707 = vadd.f32 0.0, %v706
    %708 = vdwg.mxu0
    %v709 = vmul.f32 %v172, %v492
    %v710 = vmul.f32 %v174, %v494
    %v711 = vmul.f32 %v243, %v563
    %v712 = vmul.f32 %v245, %v565
    %v713 = vmul.f32 %v314, %v634
    %v714 = vmul.f32 %v316, %v636
    %v715 = vmul.f32 %v385, %v705
    %v716 = vmul.f32 %v387, %v707
    %v725 = vcombine.low %v709, %v710
    %v726 = vcombine.low %v711, %v712
    %v728 = vunpack.c.l.s4 1983009808
    %v729 = vunpack.c.0.s8 %v728
    %v730 = vlaneseq
    %v731 = vshrl.u32 %v730, 7
    %v732 = vsub.s32 %v729, %v731
    %v733 = vrot.slane %v725, %v732
    %v735 = vunpack.c.l.s4 1983009808
    %v736 = vunpack.c.0.s8 %v735
    %v737 = vlaneseq
    %v738 = vshrl.u32 %v737, 7
    %v739 = vsub.s32 %v736, %v738
    %v740 = vrot.slane %v726, %v739
    %v741 = vcombine.low %v733, %v740
    %v742 = vcombine.low %v713, %v714
    %v743 = vcombine.low %v715, %v716
    %v745 = vunpack.c.l.s4 1983009808
    %v746 = vunpack.c.0.s8 %v745
    %v747 = vlaneseq
    %v748 = vshrl.u32 %v747, 7
    %v749 = vsub.s32 %v746, %v748
    %v750 = vrot.slane %v742, %v749
    %v752 = vunpack.c.l.s4 1983009808
    %v753 = vunpack.c.0.s8 %v752
    %v754 = vlaneseq
    %v755 = vshrl.u32 %v754, 7
    %v756 = vsub.s32 %v753, %v755
    %v757 = vrot.slane %v743, %v756
    %v758 = vcombine.low %v750, %v757
    %761 = vst [vmem:[%s4] sm:$0xff] %v741
    %762 = vst [vmem:[%s4 + $0x8] sm:$0xff] %v758
    // Predicated region
    $region34: #{apply.1} parent=1 // pred_check
      _
    $region35: #{apply.1} parent=1 // pred_check_branch
      %764 = sbr.rel (0) target = $region37
    $region36: #{apply.1} parent=1 // pred_region
      _
    $region37: #{apply.1} parent=1 // pred_fallthru
      _
    // Predicated region
    $region38: #{apply.1} parent=1 // pred_check
      _
    $region39: #{apply.1} parent=1 // pred_check_branch
      %766 = sbr.rel (0) target = $region41
    $region40: #{apply.1} parent=1 // pred_region
      _
    $region41: #{apply.1} parent=1 // pred_fallthru
      _
    %767 = vsyncpa [#allocation3], 1
    %768 = vsyncpa [#allocation5], 1
    %769 = vsyncpa [#allocation8], 1

</llo_original>
